<compile_context>
chip_gen: v6e
topology: v6e:2x2x1
jax: 0.10.0
libtpu: 0.0.40
codegen_flags: <defaults>
</compile_context>

<pallas_src>
import functools

import jax
import jax.numpy as jnp
from jax.experimental import pallas as pl
from jax.experimental.pallas import tpu as pltpu


def _roll_lanes(x, shift):
    """Rotate the lane (last) axis of a 2-D array by `shift` (jnp.roll order)."""
    size = x.shape[-1]
    shift = shift % size
    if shift == 0:
        return x
    if size % 128 == 0:
        return pltpu.roll(x, shift, axis=x.ndim - 1)  # XLU lane rotate (free-ish)
    return jnp.roll(x, shift, axis=-1)                # slice+concat fallback


def _grad_kernel_flat(x_ref, o_ref, *, W):
    # x_ref: (TB, H*W) -- channel 0 of TB images, rows flattened into lanes.
    # o_ref: (TB, H*W) -- output in o_ref.dtype.
    x = x_ref[...].astype(jnp.float32)
    L = x.shape[-1]

    # Edge masks rebuilt from a lane iota each step (VPU slack; no DMA, no VMEM).
    lane = jax.lax.broadcasted_iota(jnp.int32, (1, L), 1)
    col = lane % W
    not_first_row = lane >= W          # image row > 0
    not_last_row = lane < L - W        # image row < H-1
    not_first_col = col != 0
    not_last_col = col != W - 1

    zero = jnp.float32(0.0)
    # Rolls wrap across row / image boundaries; the wrapped lanes are exactly
    # the ones selected to 0 below, so zero-padding semantics are preserved.
    # v[i,j] = x[i+1,j] - x[i-1,j]
    v = jnp.where(not_last_row, _roll_lanes(x, L - W), zero)
    v = v - jnp.where(not_first_row, _roll_lanes(x, W), zero)
    # h[i,j] = x[i,j+1] - x[i,j-1]
    h = jnp.where(not_last_col, _roll_lanes(x, L - 1), zero)
    h = h - jnp.where(not_first_col, _roll_lanes(x, 1), zero)

    o_ref[...] = jnp.sqrt(v * v + h * h + jnp.float32(1e-6)).astype(o_ref.dtype)


def _grad_kernel_4d(x_ref, o_ref, *, H, W):
    # Always-legal fallback (H*W not a multiple of 128 and C > 1).
    # x_ref/o_ref: (TB, 1, H, W); last two block dims equal the full array dims.
    x = x_ref[...].astype(jnp.float32)
    row = jax.lax.broadcasted_iota(jnp.int32, (1, 1, H, 1), 2)
    col = jax.lax.broadcasted_iota(jnp.int32, (1, 1, 1, W), 3)
    zero = jnp.float32(0.0)

    v = jnp.where(row != H - 1, jnp.roll(x, H - 1, axis=2), zero)
    v = v - jnp.where(row != 0, jnp.roll(x, 1, axis=2), zero)
    h = jnp.where(col != W - 1, jnp.roll(x, W - 1, axis=3), zero)
    h = h - jnp.where(col != 0, jnp.roll(x, 1, axis=3), zero)

    o_ref[...] = jnp.sqrt(v * v + h * h + jnp.float32(1e-6)).astype(o_ref.dtype)


def _pick_tile_batch(N, HW, budget_elems, tile_batch):
    if tile_batch is not None:
        tb = max(1, min(int(tile_batch), N))
    else:
        tb = max(1, min(N, budget_elems // max(HW, 1)))
        if N >= 2:
            # keep >= 2 grid steps: DMA/compute overlap + v7x megacore sharding
            tb = min(tb, max(1, N // 2))
    if tb >= 8:
        tb -= tb % 8                  # sublane-friendly when possible
    while N % tb:                      # even grid: no ragged final block
        tb -= 1
    return tb


def get_gradient_nopadding(x, *, tile_batch=None):
    """x: (N, C, H, W) -> (N, 1, H, W) gradient magnitude of channel 0."""
    N, C, H, W = x.shape
    HW = H * W
    out_dtype = x.dtype if jnp.issubdtype(x.dtype, jnp.floating) else jnp.float32
    out_itemsize = jnp.dtype(out_dtype).itemsize

    # --- generation-aware VMEM budget --------------------------------------
    vmem_phys = 128 * 1024 * 1024            # v5e/v6e physical; v7x reports 64 MiB
    try:
        vmem_phys = int(getattr(pltpu.get_tpu_info(), "vmem_capacity_bytes",
                                vmem_phys))
    except Exception:
        pass
    vmem_limit = min((vmem_phys * 3) // 4, 96 * 1024 * 1024)
    # ~1/16 of the limit as the f32 working tile: in/out double buffers plus a
    # handful of live f32 temporaries stay comfortably inside the limit.
    budget_elems = max(HW, vmem_limit // (16 * 4))

    TB = _pick_tile_batch(N, HW, budget_elems, tile_batch)
    grid = (N // TB,)

    # ensure the chosen tile actually fits under the declared limit
    needed = TB * HW * (2 * x.dtype.itemsize + 2 * out_itemsize + 8 * 4)
    vmem_limit = int(min(max(vmem_limit, needed + (4 << 20)),
                         (vmem_phys * 15) // 16))

    cparams = pltpu.CompilerParams(
        dimension_semantics=("parallel",),
        vmem_limit_bytes=vmem_limit,
    )
    cost = pl.CostEstimate(
        flops=10 * N * HW,
        transcendentals=N * HW,
        bytes_accessed=N * HW * (x.dtype.itemsize + out_itemsize),
    )

    lane_dense = (HW % 128 == 0) or (C == 1)
    if lane_dense:
        try:
            # Channel 0 occupies the first H*W lanes of each flattened image
            # row; both reshapes are free contiguous merges (no HBM copies).
            xf = x.reshape(N, C * HW)
            out = pl.pallas_call(
                functools.partial(_grad_kernel_flat, W=W),
                out_shape=jax.ShapeDtypeStruct((N, HW), out_dtype),
                grid_spec=pltpu.PrefetchScalarGridSpec(
                    num_scalar_prefetch=0,
                    grid=grid,
                    in_specs=[pl.BlockSpec((TB, HW), lambda n: (n, 0))],
                    out_specs=pl.BlockSpec((TB, HW), lambda n: (n, 0)),
                ),
                compiler_params=cparams,
                cost_estimate=cost,
            )(xf)
            return out.reshape(N, 1, H, W)
        except Exception:
            pass  # never fail where the always-legal 4-D layout can serve

    out = pl.pallas_call(
        functools.partial(_grad_kernel_4d, H=H, W=W),
        out_shape=jax.ShapeDtypeStruct((N, 1, H, W), out_dtype),
        grid_spec=pltpu.PrefetchScalarGridSpec(
            num_scalar_prefetch=0,
            grid=grid,
            in_specs=[pl.BlockSpec((TB, 1, H, W), lambda n: (n, 0, 0, 0))],
            out_specs=pl.BlockSpec((TB, 1, H, W), lambda n: (n, 0, 0, 0)),
        ),
        compiler_params=cparams,
        cost_estimate=cost,
    )(x)
    return out


def _reference(x):
    """Pure-JAX reference mirroring the PyTorch forward."""
    x0 = x[:, 0].astype(jnp.float32)                  # (N, H, W)
    xp = jnp.pad(x0, ((0, 0), (1, 1), (1, 1)))
    v = xp[:, 2:, 1:-1] - xp[:, :-2, 1:-1]
    h = xp[:, 1:-1, 2:] - xp[:, 1:-1, :-2]
    return jnp.sqrt(v * v + h * h + 1e-6)[:, None, :, :]


if __name__ == "__main__":
    # Primary (lane-dense flattened) path: H*W % 128 == 0.
    N, C, H, W = 2, 4, 16, 16
    x = jax.random.normal(jax.random.PRNGKey(0), (N, C, H, W), dtype=jnp.float32)
    out = jax.block_until_ready(get_gradient_nopadding(x))
    ref = _reference(x)
    assert out.shape == (N, 1, H, W), out.shape
    assert out.dtype == x.dtype, out.dtype
    err = float(jnp.max(jnp.abs(out.astype(jnp.float32) - ref)))
    assert err < 1e-5, err

    # Fallback (4-D) path: H*W % 128 != 0, C > 1, H not a multiple of 8.
    x2 = jax.random.normal(jax.random.PRNGKey(1), (3, 2, 9, 12), dtype=jnp.float32)
    out2 = jax.block_until_ready(get_gradient_nopadding(x2))
    ref2 = _reference(x2)
    assert out2.shape == (3, 1, 9, 12), out2.shape
    err2 = float(jnp.max(jnp.abs(out2.astype(jnp.float32) - ref2)))
    assert err2 < 1e-5, err2

    print("KERNEL_OK")
</pallas_src>

<mosaic_0001>
module attributes {stable_mosaic.version = 11 : i64} {
  func.func @_grad_kernel_4d(%arg0: i32, %arg1: memref<1x1x16x16xf32, #tpu.memory_space<vmem>>, %arg2: memref<1x1x16x16xf32, #tpu.memory_space<vmem>>) attributes {dimension_semantics = [#tpu.dimension_semantics<parallel>], iteration_bounds = array<i64: 2>, scalar_prefetch = 0 : i64, scratch_operands = 0 : i64, tpu.core_type = #tpu.core_type<tc>, window_params = [{transform_indices = @transform_0, window_bounds = array<i64: 1, 1, 16, 16>}, {transform_indices = @transform_1, window_bounds = array<i64: 1, 1, 16, 16>}]} {
    %c0 = arith.constant 0 : index
    %c0_0 = arith.constant 0 : index
    %c0_1 = arith.constant 0 : index
    %c0_2 = arith.constant 0 : index
    %0 = vector.load %arg1[%c0, %c0_0, %c0_1, %c0_2] : memref<1x1x16x16xf32, #tpu.memory_space<vmem>>, vector<1x1x16x16xf32>
    %1 = tpu.iota {dimensions = array<i32: 2>} : vector<1x1x16x1xi32>
    %2 = tpu.iota {dimensions = array<i32: 3>} : vector<1x1x1x16xi32>
    %c15_i32 = arith.constant 15 : i32
    %3 = vector.broadcast %c15_i32 : i32 to vector<1x1x16x1xi32>
    %4 = arith.cmpi ne, %1, %3 : vector<1x1x16x1xi32>
    %5 = vector.extract_strided_slice %0 {offsets = [0, 0, 1, 0], sizes = [1, 1, 15, 16], strides = [1, 1, 1, 1]} : vector<1x1x16x16xf32> to vector<1x1x15x16xf32>
    %6 = vector.extract_strided_slice %0 {offsets = [0, 0, 0, 0], sizes = [1, 1, 1, 16], strides = [1, 1, 1, 1]} : vector<1x1x16x16xf32> to vector<1x1x1x16xf32>
    %7 = tpu.concatenate %5, %6 in 2 : vector<1x1x15x16xf32>, vector<1x1x1x16xf32> -> vector<1x1x16x16xf32>
    %cst = arith.constant 0.000000e+00 : f32
    %8 = vector.shape_cast %4 : vector<1x1x16x1xi1> to vector<1x1x16x1xi1>
    %9 = vector.broadcast %8 : vector<1x1x16x1xi1> to vector<1x1x16x16xi1>
    %10 = vector.broadcast %cst : f32 to vector<1x1x16x16xf32>
    %11 = arith.select %9, %7, %10 : vector<1x1x16x16xi1>, vector<1x1x16x16xf32>
    %c0_i32 = arith.constant 0 : i32
    %12 = vector.broadcast %c0_i32 : i32 to vector<1x1x16x1xi32>
    %13 = arith.cmpi ne, %1, %12 : vector<1x1x16x1xi32>
    %14 = vector.extract_strided_slice %0 {offsets = [0, 0, 15, 0], sizes = [1, 1, 1, 16], strides = [1, 1, 1, 1]} : vector<1x1x16x16xf32> to vector<1x1x1x16xf32>
    %15 = vector.extract_strided_slice %0 {offsets = [0, 0, 0, 0], sizes = [1, 1, 15, 16], strides = [1, 1, 1, 1]} : vector<1x1x16x16xf32> to vector<1x1x15x16xf32>
    %16 = tpu.concatenate %14, %15 in 2 : vector<1x1x1x16xf32>, vector<1x1x15x16xf32> -> vector<1x1x16x16xf32>
    %cst_3 = arith.constant 0.000000e+00 : f32
    %17 = vector.shape_cast %13 : vector<1x1x16x1xi1> to vector<1x1x16x1xi1>
    %18 = vector.broadcast %17 : vector<1x1x16x1xi1> to vector<1x1x16x16xi1>
    %19 = vector.broadcast %cst_3 : f32 to vector<1x1x16x16xf32>
    %20 = arith.select %18, %16, %19 : vector<1x1x16x16xi1>, vector<1x1x16x16xf32>
    %21 = arith.subf %11, %20 : vector<1x1x16x16xf32>
    %c15_i32_4 = arith.constant 15 : i32
    %22 = vector.broadcast %c15_i32_4 : i32 to vector<1x1x1x16xi32>
    %23 = arith.cmpi ne, %2, %22 : vector<1x1x1x16xi32>
    %24 = vector.extract_strided_slice %0 {offsets = [0, 0, 0, 1], sizes = [1, 1, 16, 15], strides = [1, 1, 1, 1]} : vector<1x1x16x16xf32> to vector<1x1x16x15xf32>
    %25 = vector.extract_strided_slice %0 {offsets = [0, 0, 0, 0], sizes = [1, 1, 16, 1], strides = [1, 1, 1, 1]} : vector<1x1x16x16xf32> to vector<1x1x16x1xf32>
    %26 = tpu.concatenate %24, %25 in 3 : vector<1x1x16x15xf32>, vector<1x1x16x1xf32> -> vector<1x1x16x16xf32>
    %cst_5 = arith.constant 0.000000e+00 : f32
    %27 = vector.shape_cast %23 : vector<1x1x1x16xi1> to vector<1x1x1x16xi1>
    %28 = vector.broadcast %27 : vector<1x1x1x16xi1> to vector<1x1x16x16xi1>
    %29 = vector.broadcast %cst_5 : f32 to vector<1x1x16x16xf32>
    %30 = arith.select %28, %26, %29 : vector<1x1x16x16xi1>, vector<1x1x16x16xf32>
    %c0_i32_6 = arith.constant 0 : i32
    %31 = vector.broadcast %c0_i32_6 : i32 to vector<1x1x1x16xi32>
    %32 = arith.cmpi ne, %2, %31 : vector<1x1x1x16xi32>
    %33 = vector.extract_strided_slice %0 {offsets = [0, 0, 0, 15], sizes = [1, 1, 16, 1], strides = [1, 1, 1, 1]} : vector<1x1x16x16xf32> to vector<1x1x16x1xf32>
    %34 = vector.extract_strided_slice %0 {offsets = [0, 0, 0, 0], sizes = [1, 1, 16, 15], strides = [1, 1, 1, 1]} : vector<1x1x16x16xf32> to vector<1x1x16x15xf32>
    %35 = tpu.concatenate %33, %34 in 3 : vector<1x1x16x1xf32>, vector<1x1x16x15xf32> -> vector<1x1x16x16xf32>
    %cst_7 = arith.constant 0.000000e+00 : f32
    %36 = vector.shape_cast %32 : vector<1x1x1x16xi1> to vector<1x1x1x16xi1>
    %37 = vector.broadcast %36 : vector<1x1x1x16xi1> to vector<1x1x16x16xi1>
    %38 = vector.broadcast %cst_7 : f32 to vector<1x1x16x16xf32>
    %39 = arith.select %37, %35, %38 : vector<1x1x16x16xi1>, vector<1x1x16x16xf32>
    %40 = arith.subf %30, %39 : vector<1x1x16x16xf32>
    %41 = arith.mulf %21, %21 : vector<1x1x16x16xf32>
    %42 = arith.mulf %40, %40 : vector<1x1x16x16xf32>
    %43 = arith.addf %41, %42 : vector<1x1x16x16xf32>
    %cst_8 = arith.constant 9.99999997E-7 : f32
    %44 = vector.broadcast %cst_8 : f32 to vector<1x1x16x16xf32>
    %45 = arith.addf %43, %44 : vector<1x1x16x16xf32>
    %46 = math.sqrt %45 : vector<1x1x16x16xf32>
    %c0_9 = arith.constant 0 : index
    %c0_10 = arith.constant 0 : index
    %c0_11 = arith.constant 0 : index
    %c0_12 = arith.constant 0 : index
    %47 = vector.load %arg2[%c0_9, %c0_10, %c0_11, %c0_12] : memref<1x1x16x16xf32, #tpu.memory_space<vmem>>, vector<1x1x16x16xf32>
    tpu.vector_store %arg2[%c0_9, %c0_10, %c0_11, %c0_12], %46 {strides = array<i32>} : memref<1x1x16x16xf32, #tpu.memory_space<vmem>>, vector<1x1x16x16xf32>,
    return
  }
  func.func @transform_0(%arg0: i32) -> (i32, i32, i32, i32) {
    %c0_i32 = arith.constant 0 : i32
    %c0_i32_0 = arith.constant 0 : i32
    %c0_i32_1 = arith.constant 0 : i32
    %c0_i32_2 = arith.constant 0 : i32
    return %arg0, %c0_i32, %c0_i32_0, %c0_i32_1 : i32, i32, i32, i32
  }
  func.func @transform_1(%arg0: i32) -> (i32, i32, i32, i32) {
    %c0_i32 = arith.constant 0 : i32
    %c0_i32_0 = arith.constant 0 : i32
    %c0_i32_1 = arith.constant 0 : i32
    %c0_i32_2 = arith.constant 0 : i32
    return %arg0, %c0_i32, %c0_i32_0, %c0_i32_1 : i32, i32, i32, i32
  }
}

</mosaic_0001>

<llo_original>
// kernel: tpu_custom_call.1
$region0: #{tpu_custom_call.1}
  #allocation0 [shape = 'u32[]', space=smem, size = 0x4, offset = 0x4, fixed_abs, tag = 'smem constant byte address 0x4 - core index']
  #allocation1 [shape = 'u32[144,128]{1,0:T(1,128)}', space=vmem, size = 0x12000, scoped, tag = 'internal scratch']
  %s0 = inlined_call_operand.hbm [shape: f32[2,4,16,16], index: 0, kind: input, shape index: {}]
  %s1 = inlined_call_operand.hbm [shape: f32[2,1,16,16], index: 1, kind: output, shape index: {}]
  %s2 = sld [smem:[#allocation0]]
  $region41: #{tpu_custom_call.1} parent=0
    _
  %s4 = ssub.s32 1, %s2
  %s5 = scalar_select 0, %s4, %s2
  $region1: #{tpu_custom_call.1} parent=0
    #allocation2 [shape = 'u8[16384]{0}', space=vmem, size = 0x4000, scoped, tag = 'input window, operand 0']
    #allocation3 [shape = 's32[2]{0}', space=sflag, size = 0x8, scoped, tag = 'scoped memory for tpu_custom_call.1']
    #allocation4 [shape = 's32[2]{0}', space=sflag, size = 0x8, scoped, tag = 'scoped memory for tpu_custom_call.1']
    #allocation5 [shape = 'u8[16384]{0}', space=vmem, size = 0x4000, scoped, tag = 'output window, operand 0']
    %6 = vsyncpa [#allocation3], 0
    %s7 = scalar_lea.sflag [#allocation3], 1
    %8 = vsyncpa %s7, 0
    %9 = vsyncpa [#allocation4], 0
    %s10 = scalar_lea.sflag [#allocation4], 1
    %11 = vsyncpa %s10, 0
    loop: start=0, step=1, limit=4
    $region2: #{tpu_custom_call.1} parent=1 // loop_pre_header
      _
    $region3: #{tpu_custom_call.1} parent=1 // loop_header
      %s13 = sphi 0, %s17
      %p14 = scmp.ge.s32.totalorder %s13, 4
      %s23 = sphi 0, %s25
      %s26 = sphi 0, %s23
      %s27 = sphi 0, %s26
      %s43 = sphi 0, %s27
      %s49 = sphi 0, %s51
      %s52 = sphi 0, %s49
      %s53 = sphi 0, %s52
      %s69 = sphi 0, %s53
    $region4: #{tpu_custom_call.1} parent=1 // loop_header_branch
      %16 = sbr.rel (%p14) target = $region8
    $region5: #{tpu_custom_call.1} parent=1 // loop_body
      %s18 = ssub.s32 %s13, 1
      %s19 = ssub.s32 %s13, 2
      %s20 = sadd.s32 %s13, 1
      %s21 = ssub.s32 %s13, %s20
      %p22 = scmp.eq.s32.totalorder %s21, 0
      %s24 = sadd.s32 %s23, 1
      %s25 = scalar_select %p22, %s23, %s24
      %p28 = pneg %p22
      %p29 = scmp.eq.s32.totalorder %s13, 1
      %p30 = por %p28, %p29
      %p31 = scmp.ne.s32.totalorder %s23, %s26
      %p32 = scmp.eq.s32.totalorder %s13, 0
      %p33 = por %p31, %p32
      %p34 = scmp.ne.s32.totalorder %s23, %s26
      %p35 = scmp.eq.s32.totalorder %s18, 1
      %p36 = por %p34, %p35
      %p37 = scmp.ne.s32.totalorder %s26, %s27
      %p38 = scmp.eq.s32.totalorder %s18, 0
      %p39 = por %p37, %p38
      %p40 = scmp.ne.s32.totalorder %s26, %s27
      %p41 = scmp.eq.s32.totalorder %s19, 1
      %p42 = por %p40, %p41
      %p44 = scmp.ne.s32.totalorder %s27, %s43
      %p45 = scmp.eq.s32.totalorder %s19, 0
      %p46 = por %p44, %p45
      %s47 = ssub.s32 %s13, %s20
      %p48 = scmp.eq.s32.totalorder %s47, 0
      %s50 = sadd.s32 %s49, 1
      %s51 = scalar_select %p48, %s49, %s50
      %p54 = pneg %p48
      %p55 = scmp.eq.s32.totalorder %s13, 1
      %p56 = por %p54, %p55
      %p57 = scmp.ne.s32.totalorder %s49, %s52
      %p58 = scmp.eq.s32.totalorder %s13, 0
      %p59 = por %p57, %p58
      %p60 = scmp.ne.s32.totalorder %s49, %s52
      %p61 = scmp.eq.s32.totalorder %s18, 1
      %p62 = por %p60, %p61
      %p63 = scmp.ne.s32.totalorder %s52, %s53
      %p64 = scmp.eq.s32.totalorder %s18, 0
      %p65 = por %p63, %p64
      %p66 = scmp.ne.s32.totalorder %s52, %s53
      %p67 = scmp.eq.s32.totalorder %s19, 1
      %p68 = por %p66, %p67
      %p70 = scmp.ne.s32.totalorder %s53, %s69
      %p71 = scmp.eq.s32.totalorder %s19, 0
      %p72 = por %p70, %p71
      %p73 = scmp.le.s32.totalorder 1, %s13
      %p74 = scmp.lt.s32.totalorder %s13, 3
      %p75 = pnand %p73, %p74
      %p76 = pneg %p75
      // Predicated region
      $region9: #{tpu_custom_call.1} parent=5 // pred_check
        _
      $region10: #{tpu_custom_call.1} parent=5 // pred_check_branch
        %78 = sbr.rel (%p75) target = $region12
      $region11: #{tpu_custom_call.1} parent=5 // pred_region
        %s79 = ssub.s32 %s13, 1
      $region12: #{tpu_custom_call.1} parent=5 // pred_fallthru
        _
      %p80 = scmp.lt.s32.totalorder %s13, 2
      // Predicated region
      $region13: #{tpu_custom_call.1} parent=5 // pred_check
        %p81 = pneg %p80
      $region14: #{tpu_custom_call.1} parent=5 // pred_check_branch
        %83 = sbr.rel (%p81) target = $region16
      $region15: #{tpu_custom_call.1} parent=5 // pred_region
        // Predicated region
        $region17: #{tpu_custom_call.1} parent=15 // pred_check
          %p84 = pneg %p33
        $region18: #{tpu_custom_call.1} parent=15 // pred_check_branch
          %86 = sbr.rel (%p84) target = $region20
        $region19: #{tpu_custom_call.1} parent=15 // pred_region
          %s87 = sand.u32 %s23, 1
          %s88 = scalar_lea.sflag [#allocation3], %s87
          %s89 = sand.u32 %s23, 1
          %s90 = smul.addr %s89, 16
          %s91 = scalar_lea.vmem [#allocation2], %s90
          %s93 = ssub.s32 256, 256
          %94 = vsyncadd %s88, %s93
          %s95 = smul.addr %s13, 8
          %s96 = smul.addr %s95, 128
          %s97 = scalar_lea.hbm %s0, %s96
          %s98 = sshll.u32 %s91, 4
          %s99 = int_to_ptr.vmem [resolvable:$true] %s98
          %104 = dma.hbm_to_vmem [thread:$0]  %s97, 256, %s99, %s88, 128, 128, 8
        $region20: #{tpu_custom_call.1} parent=15 // pred_fallthru
          _
      $region16: #{tpu_custom_call.1} parent=5 // pred_fallthru
        _
      %p105 = scmp.le.s32.totalorder 1, %s13
      %p106 = scmp.lt.s32.totalorder %s13, 3
      %p107 = pnand %p105, %p106
      %p108 = pneg %p107
      // Predicated region
      $region21: #{tpu_custom_call.1} parent=5 // pred_check
        _
      $region22: #{tpu_custom_call.1} parent=5 // pred_check_branch
        %110 = sbr.rel (%p107) target = $region24
      $region23: #{tpu_custom_call.1} parent=5 // pred_region
        %s111 = ssub.s32 %s13, 1
        %s112 = sand.u32 %s26, 1
        %s113 = scalar_lea.sflag [#allocation3], %s112
        %s114 = sand.u32 %s26, 1
        %s115 = smul.addr %s114, 16
        %s116 = scalar_lea.vmem [#allocation2], %s115
        // Predicated region
        $region25: #{tpu_custom_call.1} parent=23 // pred_check
          %p117 = pneg %p39
        $region26: #{tpu_custom_call.1} parent=23 // pred_check_branch
          %119 = sbr.rel (%p117) target = $region28
        $region27: #{tpu_custom_call.1} parent=23 // pred_region
          %120 = dma.done %s113, 256
        $region28: #{tpu_custom_call.1} parent=23 // pred_fallthru
          _
        %s121 = sand.u32 %s26, 1
        %s122 = scalar_lea.sflag [#allocation3], %s121
        %s123 = sand.u32 %s26, 1
        %s124 = smul.addr %s123, 16
        %s125 = scalar_lea.vmem [#allocation2], %s124
        %p126 = pneg %p39
        %p127 = pneg %p36
        %p128 = pneg %p65
        %p129 = pneg %p62
        %s130 = sand.u32 %s52, 1
        %s131 = scalar_lea.sflag [#allocation4], %s130
        %s132 = sand.u32 %s52, 1
        %s133 = smul.addr %s132, 16
        %s134 = scalar_lea.vmem [#allocation5], %s133
        %v135 = vld [vmem:[%s116] sm:$0xff]
        %v136 = vld [vmem:[%s116 + $0x8] sm:$0xff]
        %v137 = vlaneseq
        %v138 = vshrl.u32 %v137, 7
        %v139 = vadd.s32 %v138, 8
        %v140 = vlaneseq
        %v141 = vand.u32 %v140, 127
        %vm142 = vcmp.ne.s32.totalorder %v138, 15
        %vm143 = vcmp.ne.s32.totalorder %v139, 15
        %vm146 = vcmask 1046528
        %v147 = vrot.slane %v135, 1
        %v148 = vrot.slane %v136, 1
        %v149 = vsel %vm146, %v147, %v148
        %v153 = vsel %vm146, %v148, %v147
        %v154 = vsel %vm142, 1, 0
        %v155 = vsel %vm143, 1, 0
        %vm156 = vcmp.eq.s32.totalorder %v154, 1
        %vm157 = vcmp.eq.s32.totalorder %v155, 1
        %v158 = vsel %vm156, %v149, 0.0
        %v159 = vsel %vm157, %v153, 0.0
        %vm160 = vcmp.ne.s32.totalorder %v138, 0
        %vm161 = vcmp.ne.s32.totalorder %v139, 0
        %v162 = vrot.slane %v136, 7
        %vm164 = vcmask 1040384
        %v165 = vrot.slane %v135, 7
        %v166 = vsel %vm164, %v165, %v162
        %v169 = vsel %vm164, %v162, %v165
        %v170 = vsel %vm160, 1, 0
        %v171 = vsel %vm161, 1, 0
        %vm172 = vcmp.eq.s32.totalorder %v170, 1
        %vm173 = vcmp.eq.s32.totalorder %v171, 1
        %v174 = vsel %vm172, %v169, 0.0
        %v175 = vsel %vm173, %v166, 0.0
        %v176 = vsub.f32 %v158, %v174
        %v177 = vsub.f32 %v159, %v175
        %vm178 = vcmp.ne.s32.totalorder %v141, 15
        %179 = vrot.lane.b32.xlu0 %v135, 127
        %v180 = vpop.permute.xlu0 %179
        %181 = vrot.lane.b32.xlu0 %v136, 127
        %v182 = vpop.permute.xlu0 %181
        %185 = vrot.lane.b32.xlu0 %v135, 15
        %v186 = vpop.permute.xlu0 %185
        %187 = vrot.lane.b32.xlu0 %v136, 15
        %v188 = vpop.permute.xlu0 %187
        %vm191 = vcmask 121856
        %v192 = vsel %vm191, %v180, %v186
        %v193 = vsel %vm191, %v182, %v188
        %v194 = vsel %vm178, 1, 0
        %vm195 = vcmp.eq.s32.totalorder %v194, 1
        %v196 = vsel %vm195, %v192, 0.0
        %v197 = vsel %vm195, %v193, 0.0
        %vm198 = vcmp.ne.s32.totalorder %v141, 0
        %199 = vrot.lane.b32.xlu0 %v135, 113
        %v200 = vpop.permute.xlu0 %199
        %201 = vrot.lane.b32.xlu0 %v136, 113
        %v202 = vpop.permute.xlu0 %201
        %205 = vrot.lane.b32.xlu0 %v135, 1
        %v206 = vpop.permute.xlu0 %205
        %207 = vrot.lane.b32.xlu0 %v136, 1
        %v208 = vpop.permute.xlu0 %207
        %vm211 = vcmask 7168
        %v212 = vsel %vm211, %v200, %v206
        %v213 = vsel %vm211, %v202, %v208
        %v214 = vsel %vm198, 1, 0
        %vm215 = vcmp.eq.s32.totalorder %v214, 1
        %v216 = vsel %vm215, %v212, 0.0
        %v217 = vsel %vm215, %v213, 0.0
        %v218 = vsub.f32 %v196, %v216
        %v219 = vsub.f32 %v197, %v217
        %v220 = vmul.f32 %v176, %v176
        %v221 = vmul.f32 %v177, %v177
        %v222 = vmul.f32 %v218, %v218
        %v223 = vmul.f32 %v219, %v219
        %v224 = vadd.f32 %v220, %v222
        %v225 = vadd.f32 %v221, %v223
        %v226 = vadd.f32 %v224, 1e-06
        %v227 = vadd.f32 %v225, 1e-06
        %v228 = vrsqrt.pop %v226
        %v229 = vmul.f32 %v226, %v228
        %vm230 = vcmp.eq.f32.partialorder %v226, inf
        %v231 = vsel %vm230, %v226, %v229
        %vm232 = vcmp.eq.f32.partialorder %v226, 0.0
        %v233 = vand.u32 %v226, 2147483648
        %v234 = vsel %vm232, %v233, %v231
        %v235 = vrsqrt.pop %v227
        %v236 = vmul.f32 %v227, %v235
        %vm237 = vcmp.eq.f32.partialorder %v227, inf
        %v238 = vsel %vm237, %v227, %v236
        %vm239 = vcmp.eq.f32.partialorder %v227, 0.0
        %v240 = vand.u32 %v227, 2147483648
        %v241 = vsel %vm239, %v240, %v238
        %vm242 = vcmask 130048
        %243 = vst.msk [vmem:[%s134] sm:$0xff] %vm242, %v234
        %244 = vst.msk [vmem:[%s134 + $0x8] sm:$0xff] %vm242, %v241
        %s245 = sand.u32 %s52, 1
        %s246 = scalar_lea.sflag [#allocation4], %s245
        %s247 = sand.u32 %s52, 1
        %s248 = smul.addr %s247, 16
        %s249 = scalar_lea.vmem [#allocation5], %s248
        // Predicated region
        $region29: #{tpu_custom_call.1} parent=23 // pred_check
          %p250 = pneg %p62
        $region30: #{tpu_custom_call.1} parent=23 // pred_check_branch
          %252 = sbr.rel (%p250) target = $region32
        $region31: #{tpu_custom_call.1} parent=23 // pred_region
          %s254 = ssub.s32 256, 256
          %255 = vsyncadd %s246, %s254
          %s256 = smul.addr %s18, 2
          %s257 = smul.addr %s256, 128
          %s258 = scalar_lea.hbm %s1, %s257
          %s259 = sshll.u32 %s249, 4
          %s260 = int_to_ptr.vmem [resolvable:$true] %s259
          %265 = dma.vmem_to_hbm [thread:$0]  %s260, 256, %s258, %s246, 128, 128, 8
        $region32: #{tpu_custom_call.1} parent=23 // pred_fallthru
          _
      $region24: #{tpu_custom_call.1} parent=5 // pred_fallthru
        _
      %p266 = scmp.le.s32.totalorder 2, %s13
      // Predicated region
      $region33: #{tpu_custom_call.1} parent=5 // pred_check
        %p267 = pneg %p266
      $region34: #{tpu_custom_call.1} parent=5 // pred_check_branch
        %269 = sbr.rel (%p267) target = $region36
      $region35: #{tpu_custom_call.1} parent=5 // pred_region
        %s270 = ssub.s32 %s13, 2
        // Predicated region
        $region37: #{tpu_custom_call.1} parent=35 // pred_check
          %p271 = pneg %p68
        $region38: #{tpu_custom_call.1} parent=35 // pred_check_branch
          %273 = sbr.rel (%p271) target = $region40
        $region39: #{tpu_custom_call.1} parent=35 // pred_region
          %s274 = sand.u32 %s53, 1
          %s275 = scalar_lea.sflag [#allocation4], %s274
          %s276 = sand.u32 %s53, 1
          %s277 = smul.addr %s276, 16
          %s278 = scalar_lea.vmem [#allocation5], %s277
          %279 = dma.done %s275, 256
        $region40: #{tpu_custom_call.1} parent=35 // pred_fallthru
          _
      $region36: #{tpu_custom_call.1} parent=5 // pred_fallthru
        _
    $region6: #{tpu_custom_call.1} parent=1 // loop_footer
      %s17 = sadd.s32 1, %s13
    $region7: #{tpu_custom_call.1} parent=1 // loop_footer_branch
      %12 = sbr.rel target = $region3
    $region8: #{tpu_custom_call.1} parent=1 // loop_exit
      _
    %280 = vsyncpa [#allocation3], 1
    %s281 = scalar_lea.sflag [#allocation3], 1
    %282 = vsyncpa %s281, 1
    %283 = vsyncpa [#allocation4], 1
    %s284 = scalar_lea.sflag [#allocation4], 1
    %285 = vsyncpa %s284, 1

</llo_original>
